<compile_context>
chip_gen: v5e
topology: v5e:2x2
jax: 0.10.0
libtpu: 0.0.40
codegen_flags: <defaults>
</compile_context>

<pallas_src>
import jax
import jax.numpy as jnp
from jax.experimental import pallas as pl
from jax.experimental.pallas import tpu as pltpu

# ---- problem sizes (small, consistent with the module defaults scaled down) ----
B = 4                 # batch
STATE_DIM = 10
ACTION_DIM = 4
HIDDEN = 32           # hidden_dim
HALF = HIDDEN // 2    # 16
LANG = 64             # language_model hidden size (synthetic)
ENSEMBLE = 5
EPAD = 8              # ensemble heads padded to 8 lanes (exact zeros in 5..7)
FUSION = LANG + HIDDEN + HALF     # 112
EWIDE = ENSEMBLE * HIDDEN         # 160  (all ensemble layer-1 hiddens, fused)
WIDE = EWIDE + HIDDEN             # 192  (ensemble + detector layer-1, fused)
X_WIDTH = 128                     # packed layer-1 operand width (one lane tile)
LN_EPS = 1e-5


def _relu(x):
    return jnp.maximum(x, 0.0)


def _layernorm(x, g, b):
    mu = jnp.mean(x, axis=-1, keepdims=True)
    var = jnp.mean(jnp.square(x - mu), axis=-1, keepdims=True)
    return (x - mu) * jax.lax.rsqrt(var + LN_EPS) * g + b


# ---------------------------------------------------------------------------
# Kernel: 4 small activation inputs + 3 packed weight slabs, 1 lane-dense output
# ---------------------------------------------------------------------------
def reward_kernel(lang_ref, state_ref, action_ref, pen_ref,
                  wf_ref, ws_ref, b_ref, out_ref, xpack_ref):
    f32 = jnp.float32
    lang = lang_ref[...]          # (B, 64)
    state = state_ref[...]        # (B, 16)  zero-padded lanes 10..15
    action = action_ref[...]      # (B, 16)  zero-padded lanes 4..15
    pen = pen_ref[...]            # (B, 1)
    b = b_ref[...]                # (16, 192) biases / LN params / detector head

    bs1, gs1, hs1 = b[0:1, :HIDDEN], b[1:2, :HIDDEN], b[2:3, :HIDDEN]
    bs2, gs2, hs2 = b[3:4, :HIDDEN], b[4:5, :HIDDEN], b[5:6, :HIDDEN]
    ba1, ga1, ha1 = b[6:7, :HALF], b[7:8, :HALF], b[8:9, :HALF]
    ba2 = b[9:10, :HALF]
    b1f = b[10:11, :]             # (1, 192) fused layer-1 bias [be1(160) | bd1(32)]
    b2c = b[11:12, :HIDDEN]       # (1, 32)  [be2(5) | 0(3) | bd2(16) | 0(8)]
    w_adv = b[12:13, :HIDDEN]     # (1, 32)  [0(8) | wd3[:,1]-wd3[:,0] (16) | 0(8)]
    b_adv = b[13:14, 0:1]         # (1, 1)   bd3[1] - bd3[0]

    # ---- state encoder: Linear -> ReLU -> LN -> Linear -> ReLU -> LN ----
    h = _relu(jnp.dot(state, ws_ref[0:16, :], preferred_element_type=f32) + bs1)
    h = _layernorm(h, gs1, hs1)
    h = _relu(jnp.dot(h, ws_ref[16:48, :], preferred_element_type=f32) + bs2)
    state_feat = _layernorm(h, gs2, hs2)                                   # (B, 32)

    # ---- action encoder: Linear -> ReLU -> LN -> Linear -> ReLU ----
    a = _relu(jnp.dot(action, ws_ref[48:64, 0:HALF], preferred_element_type=f32) + ba1)
    a = _layernorm(a, ga1, ha1)
    action_feat = _relu(jnp.dot(a, ws_ref[64:80, 0:HALF],
                                preferred_element_type=f32) + ba2)         # (B, 16)

    # ---- fused layer-1: pack [lang | state_feat | action_feat | 0] (B,128) in VMEM
    #      and run ONE K=128 matmul against the 128x192 fused weight slab.  ----
    xpack_ref[...] = jnp.zeros(xpack_ref.shape, f32)
    xpack_ref[:, 0:LANG] = lang
    xpack_ref[:, LANG:LANG + HIDDEN] = state_feat
    xpack_ref[:, LANG + HIDDEN:FUSION] = action_feat
    h1 = _relu(jnp.dot(xpack_ref[...], wf_ref[...],
                       preferred_element_type=f32) + b1f)                  # (B, 192)

    # ---- fused layer-2: ensemble block-diag heads (lanes 0..4) and detector
    #      hidden (lanes 8..23) in ONE matmul; lanes 5..7 and 24..31 are zero. ----
    y2 = jnp.dot(h1, ws_ref[80:272, :], preferred_element_type=f32) + b2c  # (B, 32)

    lane = jax.lax.broadcasted_iota(jnp.int32, y2.shape, 1)
    heads = jnp.where(lane < EPAD, y2, 0.0)                 # lanes 5..7 exactly zero
    mean_r = jnp.sum(heads, axis=-1, keepdims=True) * (1.0 / ENSEMBLE)
    d = jnp.where(lane < ENSEMBLE, y2 - mean_r, 0.0)
    std_r = jnp.sqrt(jnp.sum(d * d, axis=-1, keepdims=True) * (1.0 / (ENSEMBLE - 1)))

    # ---- adversarial detector: softmax(z)[:,1] over 2 logits == sigmoid(z1-z0) ----
    hd2 = _relu(y2)                                          # detector hidden in lanes 8..23
    adv_logit = jnp.sum(hd2 * w_adv, axis=-1, keepdims=True) + b_adv
    adv = pl.reciprocal(1.0 + jnp.exp(-adv_logit), approx=True)

    robust = mean_r - 0.5 * std_r - 2.0 * adv - pen

    # ---- lane-dense fused store: [reward | mean | std | adv | 0 ... 0] ----
    lane_o = jax.lax.broadcasted_iota(jnp.int32, out_ref.shape, 1)
    out_ref[...] = jnp.where(lane_o == 0, robust,
                   jnp.where(lane_o == 1, mean_r,
                   jnp.where(lane_o == 2, std_r,
                   jnp.where(lane_o == 3, adv, 0.0))))


# ---------------------------------------------------------------------------
# Wrapper
# ---------------------------------------------------------------------------
@jax.jit
def robust_reward_pallas(lang, state, action, penalty, w_fused, w_small, biases):
    bn = lang.shape[0]
    # Only two tiny pads remain wrapper-side (no (8,128) slab assembly).
    state16 = jnp.pad(state.astype(jnp.float32), ((0, 0), (0, 16 - STATE_DIM)))
    action16 = jnp.pad(action.astype(jnp.float32), ((0, 0), (0, 16 - ACTION_DIM)))

    vmem = pl.BlockSpec(memory_space=pltpu.MemorySpace.VMEM)
    out = pl.pallas_call(
        reward_kernel,
        out_shape=jax.ShapeDtypeStruct((bn, X_WIDTH), jnp.float32),
        in_specs=[vmem] * 7,
        out_specs=vmem,
        scratch_shapes=[pltpu.VMEM((bn, X_WIDTH), jnp.float32)],
    )(lang, state16, action16, penalty, w_fused, w_small, biases)
    return {
        "reward": out[:, 0],
        "mean_reward": out[:, 1],
        "uncertainty": out[:, 2],
        "adversarial_score": out[:, 3],
        "safety_penalty": penalty[:, 0],
    }


# ---------------------------------------------------------------------------
# Parameters: torch-structured init + packing into the 3 weight/bias slabs
# ---------------------------------------------------------------------------
def make_params(key):
    ks = jax.random.split(key, 30)
    n = lambda k, s, scale=0.1: jax.random.normal(k, s, dtype=jnp.float32) * scale
    return {
        # state encoder
        "ws1": n(ks[0], (STATE_DIM, HIDDEN)), "bs1": n(ks[1], (HIDDEN,), 0.05),
        "gs1": 1.0 + n(ks[2], (HIDDEN,), 0.05), "hs1": n(ks[3], (HIDDEN,), 0.05),
        "ws2": n(ks[4], (HIDDEN, HIDDEN)), "bs2": n(ks[5], (HIDDEN,), 0.05),
        "gs2": 1.0 + n(ks[6], (HIDDEN,), 0.05), "hs2": n(ks[7], (HIDDEN,), 0.05),
        # action encoder
        "wa1": n(ks[8], (ACTION_DIM, HALF)), "ba1": n(ks[9], (HALF,), 0.05),
        "ga1": 1.0 + n(ks[10], (HALF,), 0.05), "ha1": n(ks[11], (HALF,), 0.05),
        "wa2": n(ks[12], (HALF, HALF)), "ba2": n(ks[13], (HALF,), 0.05),
        # reward ensemble
        "we1": n(ks[14], (ENSEMBLE, FUSION, HIDDEN)), "be1": n(ks[15], (ENSEMBLE, HIDDEN), 0.01),
        "we2": n(ks[16], (ENSEMBLE, HIDDEN, 1)), "be2": n(ks[17], (ENSEMBLE,), 0.01),
        # adversarial detector
        "wd1": n(ks[18], (FUSION, HIDDEN)), "bd1": n(ks[19], (HIDDEN,), 0.05),
        "wd2": n(ks[20], (HIDDEN, HALF)), "bd2": n(ks[21], (HALF,), 0.05),
        "wd3": n(ks[22], (HALF, 2)), "bd3": n(ks[23], (2,), 0.05),
    }


def pack_params(P):
    f32 = jnp.float32

    # -- fused layer-1 weights, padded to 128 rows for the single K=128 matmul:
    #    rows 0:64 lang, 64:96 state_feat, 96:112 action_feat, 112:128 zero;
    #    cols [ensemble heads (160) | detector layer-1 (32)] --
    we1_wide = jnp.transpose(P["we1"], (1, 0, 2)).reshape(FUSION, EWIDE)       # (112,160)
    wf = jnp.concatenate([we1_wide, P["wd1"]], axis=1)                          # (112,192)
    w_fused = jnp.pad(wf, ((0, X_WIDTH - FUSION), (0, 0))).astype(f32)          # (128,192)

    # -- small-weight slab (width 32), zero-padded so row/col slices stay static --
    ws1p = jnp.pad(P["ws1"], ((0, 16 - STATE_DIM), (0, 0)))                     # (16,32)
    wa1p = jnp.pad(P["wa1"], ((0, 16 - ACTION_DIM), (0, HIDDEN - HALF)))        # (16,32)
    wa2p = jnp.pad(P["wa2"], ((0, 0), (0, HIDDEN - HALF)))                      # (16,32)
    # fused layer-2 weight: cols 0:8 block-diag ensemble heads (rows 0:160),
    # cols 8:24 detector wd2 (rows 160:192), everything else zero.
    w2c = jnp.zeros((WIDE, HIDDEN), f32)                                        # (192,32)
    for e in range(ENSEMBLE):
        w2c = w2c.at[e * HIDDEN:(e + 1) * HIDDEN, e].set(P["we2"][e, :, 0])
    w2c = w2c.at[EWIDE:WIDE, EPAD:EPAD + HALF].set(P["wd2"])
    w_small = jnp.concatenate([ws1p, P["ws2"], wa1p, wa2p, w2c], axis=0).astype(f32)  # (272,32)

    # -- bias / LN / detector-head slab --
    bias = jnp.zeros((16, WIDE), f32)
    def row(bm, r, v):
        return bm.at[r, :v.shape[0]].set(v)
    bias = row(bias, 0, P["bs1"]); bias = row(bias, 1, P["gs1"]); bias = row(bias, 2, P["hs1"])
    bias = row(bias, 3, P["bs2"]); bias = row(bias, 4, P["gs2"]); bias = row(bias, 5, P["hs2"])
    bias = row(bias, 6, P["ba1"]); bias = row(bias, 7, P["ga1"]); bias = row(bias, 8, P["ha1"])
    bias = row(bias, 9, P["ba2"])
    bias = row(bias, 10, jnp.concatenate([P["be1"].reshape(-1), P["bd1"]]))     # fused layer-1 bias
    b2c = jnp.zeros((HIDDEN,), f32).at[:ENSEMBLE].set(P["be2"])
    b2c = b2c.at[EPAD:EPAD + HALF].set(P["bd2"])
    bias = row(bias, 11, b2c)                                                   # fused layer-2 bias
    w_adv = jnp.zeros((HIDDEN,), f32).at[EPAD:EPAD + HALF].set(P["wd3"][:, 1] - P["wd3"][:, 0])
    bias = row(bias, 12, w_adv)                                                 # detector head weight
    bias = row(bias, 13, (P["bd3"][1] - P["bd3"][0]).reshape(1))                # detector head bias
    return w_fused, w_small, bias


# ---------------------------------------------------------------------------
# Pure-JAX reference (torch-structured, unfused) for correctness checking
# ---------------------------------------------------------------------------
def reference(lang, state, action, pen, P):
    relu = lambda v: jnp.maximum(v, 0.0)
    def ln(v, g, b_):
        mu = jnp.mean(v, -1, keepdims=True)
        var = jnp.mean((v - mu) ** 2, -1, keepdims=True)
        return (v - mu) * jax.lax.rsqrt(var + LN_EPS) * g + b_
    h = ln(relu(state @ P["ws1"] + P["bs1"]), P["gs1"], P["hs1"])
    sf = ln(relu(h @ P["ws2"] + P["bs2"]), P["gs2"], P["hs2"])
    a = ln(relu(action @ P["wa1"] + P["ba1"]), P["ga1"], P["ha1"])
    af = relu(a @ P["wa2"] + P["ba2"])
    comb = jnp.concatenate([lang, sf, af], axis=-1)
    heads = []
    for e in range(ENSEMBLE):
        he = relu(comb @ P["we1"][e] + P["be1"][e])
        heads.append(he @ P["we2"][e] + P["be2"][e])          # (B,1), dropout = identity
    rewards = jnp.stack(heads, 0)                             # (E,B,1)
    mean_r = jnp.mean(rewards, axis=0)
    std_r = jnp.std(rewards, axis=0, ddof=1)                  # torch.std is unbiased
    hd = relu(comb @ P["wd1"] + P["bd1"])
    hd = relu(hd @ P["wd2"] + P["bd2"])
    z = hd @ P["wd3"] + P["bd3"]
    adv = jax.nn.softmax(z, axis=-1)[:, 1:2]
    robust = mean_r - 0.5 * std_r - 2.0 * adv - pen
    return robust, mean_r, std_r, adv


SAFETY_KEYWORDS = ["crash", "collide", "break", "damage", "hurt", "destroy"]


def safety_penalty_host(instructions):
    # Host-side string rule matching (mirrors _compute_safety_penalty).
    pen = []
    for inst in instructions:
        p = 0.0
        for kw in SAFETY_KEYWORDS:
            if kw in inst.lower():
                p += 5.0
        pen.append(p)
    return jnp.asarray(pen, dtype=jnp.float32).reshape(-1, 1)


if __name__ == "__main__":
    key = jax.random.PRNGKey(0)
    k_lang, k_state, k_action, k_params = jax.random.split(key, 4)

    instructions = [
        "navigate to the goal safely",
        "crash into the obstacle quickly",
        "pick up the red block",
        "do not damage the robot arm",
    ]
    assert len(instructions) == B

    # TODO(synk): BERT CLS embeddings are replaced by a deterministic synthetic
    # language-feature tensor; running a pretrained LM is out of kernel scope.
    lang = jax.random.normal(k_lang, (B, LANG), dtype=jnp.float32)
    state = jax.random.normal(k_state, (B, STATE_DIM), dtype=jnp.float32)
    action = jax.random.normal(k_action, (B, ACTION_DIM), dtype=jnp.float32)
    penalty = safety_penalty_host(instructions)

    P = make_params(k_params)
    w_fused, w_small, biases = pack_params(P)

    out = robust_reward_pallas(lang, state, action, penalty, w_fused, w_small, biases)
    jax.block_until_ready(out)

    # Pure-JAX reference check (torch-structured math, no Pallas, no fusion).
    ref_r, ref_m, ref_s, ref_a = reference(lang, state, action, penalty, P)
    assert jnp.allclose(out["reward"], ref_r[:, 0], rtol=1e-3, atol=1e-3)
    assert jnp.allclose(out["mean_reward"], ref_m[:, 0], rtol=1e-3, atol=1e-3)
    assert jnp.allclose(out["uncertainty"], ref_s[:, 0], rtol=1e-3, atol=1e-3)
    assert jnp.allclose(out["adversarial_score"], ref_a[:, 0], rtol=1e-3, atol=1e-3)

    print("KERNEL_OK")
</pallas_src>

<mosaic_0001>
module attributes {stable_mosaic.version = 11 : i64} {
  func.func @reward_kernel(%arg0: memref<4x64xf32, #tpu.memory_space<vmem>>, %arg1: memref<4x16xf32, #tpu.memory_space<vmem>>, %arg2: memref<4x16xf32, #tpu.memory_space<vmem>>, %arg3: memref<4x1xf32, #tpu.memory_space<vmem>>, %arg4: memref<128x192xf32, #tpu.memory_space<vmem>>, %arg5: memref<272x32xf32, #tpu.memory_space<vmem>>, %arg6: memref<16x192xf32, #tpu.memory_space<vmem>>, %arg7: memref<4x128xf32, #tpu.memory_space<vmem>>, %arg8: memref<4x128xf32, #tpu.memory_space<vmem>>) attributes {dimension_semantics = [], scalar_prefetch = 0 : i64, scratch_operands = 1 : i64, tpu.core_type = #tpu.core_type<tc>} {
    %c0 = arith.constant 0 : index
    %c0_0 = arith.constant 0 : index
    %0 = vector.load %arg0[%c0, %c0_0] : memref<4x64xf32, #tpu.memory_space<vmem>>, vector<4x64xf32>
    %c0_1 = arith.constant 0 : index
    %c0_2 = arith.constant 0 : index
    %1 = vector.load %arg1[%c0_1, %c0_2] : memref<4x16xf32, #tpu.memory_space<vmem>>, vector<4x16xf32>
    %c0_3 = arith.constant 0 : index
    %c0_4 = arith.constant 0 : index
    %2 = vector.load %arg2[%c0_3, %c0_4] : memref<4x16xf32, #tpu.memory_space<vmem>>, vector<4x16xf32>
    %c0_5 = arith.constant 0 : index
    %c0_6 = arith.constant 0 : index
    %3 = vector.load %arg3[%c0_5, %c0_6] : memref<4x1xf32, #tpu.memory_space<vmem>>, vector<4x1xf32>
    %c0_7 = arith.constant 0 : index
    %c0_8 = arith.constant 0 : index
    %4 = vector.load %arg6[%c0_7, %c0_8] : memref<16x192xf32, #tpu.memory_space<vmem>>, vector<16x192xf32>
    %5 = vector.extract_strided_slice %4 {offsets = [0, 0], sizes = [1, 32], strides = [1, 1]} : vector<16x192xf32> to vector<1x32xf32>
    %6 = vector.extract_strided_slice %4 {offsets = [1, 0], sizes = [1, 32], strides = [1, 1]} : vector<16x192xf32> to vector<1x32xf32>
    %7 = vector.extract_strided_slice %4 {offsets = [2, 0], sizes = [1, 32], strides = [1, 1]} : vector<16x192xf32> to vector<1x32xf32>
    %8 = vector.extract_strided_slice %4 {offsets = [3, 0], sizes = [1, 32], strides = [1, 1]} : vector<16x192xf32> to vector<1x32xf32>
    %9 = vector.extract_strided_slice %4 {offsets = [4, 0], sizes = [1, 32], strides = [1, 1]} : vector<16x192xf32> to vector<1x32xf32>
    %10 = vector.extract_strided_slice %4 {offsets = [5, 0], sizes = [1, 32], strides = [1, 1]} : vector<16x192xf32> to vector<1x32xf32>
    %11 = vector.extract_strided_slice %4 {offsets = [6, 0], sizes = [1, 16], strides = [1, 1]} : vector<16x192xf32> to vector<1x16xf32>
    %12 = vector.extract_strided_slice %4 {offsets = [7, 0], sizes = [1, 16], strides = [1, 1]} : vector<16x192xf32> to vector<1x16xf32>
    %13 = vector.extract_strided_slice %4 {offsets = [8, 0], sizes = [1, 16], strides = [1, 1]} : vector<16x192xf32> to vector<1x16xf32>
    %14 = vector.extract_strided_slice %4 {offsets = [9, 0], sizes = [1, 16], strides = [1, 1]} : vector<16x192xf32> to vector<1x16xf32>
    %15 = vector.extract_strided_slice %4 {offsets = [10, 0], sizes = [1, 192], strides = [1, 1]} : vector<16x192xf32> to vector<1x192xf32>
    %16 = vector.extract_strided_slice %4 {offsets = [11, 0], sizes = [1, 32], strides = [1, 1]} : vector<16x192xf32> to vector<1x32xf32>
    %17 = vector.extract_strided_slice %4 {offsets = [12, 0], sizes = [1, 32], strides = [1, 1]} : vector<16x192xf32> to vector<1x32xf32>
    %18 = vector.extract_strided_slice %4 {offsets = [13, 0], sizes = [1, 1], strides = [1, 1]} : vector<16x192xf32> to vector<1x1xf32>
    %c0_9 = arith.constant 0 : index
    %c0_10 = arith.constant 0 : index
    %19 = vector.load %arg5[%c0_9, %c0_10] : memref<272x32xf32, #tpu.memory_space<vmem>>, vector<16x32xf32>
    %cst = arith.constant dense<0.000000e+00> : vector<4x32xf32>
    %20 = tpu.matmul %1, %19, %cst {dimension_numbers = #tpu.dot_dimension_numbers<[1], [0], [0], [1], [0, 0, 1, 1], [], []>} : vector<4x16xf32>, vector<16x32xf32>, vector<4x32xf32> -> vector<4x32xf32>
    %21 = vector.broadcast %5 : vector<1x32xf32> to vector<4x32xf32>
    %22 = arith.addf %20, %21 : vector<4x32xf32>
    %cst_11 = arith.constant 0.000000e+00 : f32
    %23 = vector.broadcast %cst_11 : f32 to vector<4x32xf32>
    %24 = arith.maximumf %22, %23 : vector<4x32xf32>
    %cst_12 = arith.constant dense<0.000000e+00> : vector<4xf32>
    %25 = vector.multi_reduction <add>, %24, %cst_12 [1] : vector<4x32xf32> to vector<4xf32>
    %26 = vector.shape_cast %25 : vector<4xf32> to vector<4x1xf32>
    %cst_13 = arith.constant 3.200000e+01 : f32
    %27 = vector.broadcast %cst_13 : f32 to vector<4x1xf32>
    %28 = arith.divf %26, %27 : vector<4x1xf32>
    %29 = vector.broadcast %28 : vector<4x1xf32> to vector<4x32xf32>
    %30 = arith.subf %24, %29 : vector<4x32xf32>
    %31 = arith.mulf %30, %30 : vector<4x32xf32>
    %cst_14 = arith.constant dense<0.000000e+00> : vector<4xf32>
    %32 = vector.multi_reduction <add>, %31, %cst_14 [1] : vector<4x32xf32> to vector<4xf32>
    %33 = vector.shape_cast %32 : vector<4xf32> to vector<4x1xf32>
    %cst_15 = arith.constant 3.200000e+01 : f32
    %34 = vector.broadcast %cst_15 : f32 to vector<4x1xf32>
    %35 = arith.divf %33, %34 : vector<4x1xf32>
    %36 = vector.broadcast %28 : vector<4x1xf32> to vector<4x32xf32>
    %37 = arith.subf %24, %36 : vector<4x32xf32>
    %cst_16 = arith.constant 9.99999974E-6 : f32
    %38 = vector.broadcast %cst_16 : f32 to vector<4x1xf32>
    %39 = arith.addf %35, %38 : vector<4x1xf32>
    %40 = math.rsqrt %39 : vector<4x1xf32>
    %41 = vector.broadcast %40 : vector<4x1xf32> to vector<4x32xf32>
    %42 = arith.mulf %37, %41 : vector<4x32xf32>
    %43 = vector.broadcast %6 : vector<1x32xf32> to vector<4x32xf32>
    %44 = arith.mulf %42, %43 : vector<4x32xf32>
    %45 = vector.broadcast %7 : vector<1x32xf32> to vector<4x32xf32>
    %46 = arith.addf %44, %45 : vector<4x32xf32>
    %c16 = arith.constant 16 : index
    %c0_17 = arith.constant 0 : index
    %47 = vector.load %arg5[%c16, %c0_17] : memref<272x32xf32, #tpu.memory_space<vmem>>, vector<32x32xf32>
    %cst_18 = arith.constant dense<0.000000e+00> : vector<4x32xf32>
    %48 = tpu.matmul %46, %47, %cst_18 {dimension_numbers = #tpu.dot_dimension_numbers<[1], [0], [0], [1], [0, 0, 1, 1], [], []>} : vector<4x32xf32>, vector<32x32xf32>, vector<4x32xf32> -> vector<4x32xf32>
    %49 = vector.broadcast %8 : vector<1x32xf32> to vector<4x32xf32>
    %50 = arith.addf %48, %49 : vector<4x32xf32>
    %cst_19 = arith.constant 0.000000e+00 : f32
    %51 = vector.broadcast %cst_19 : f32 to vector<4x32xf32>
    %52 = arith.maximumf %50, %51 : vector<4x32xf32>
    %cst_20 = arith.constant dense<0.000000e+00> : vector<4xf32>
    %53 = vector.multi_reduction <add>, %52, %cst_20 [1] : vector<4x32xf32> to vector<4xf32>
    %54 = vector.shape_cast %53 : vector<4xf32> to vector<4x1xf32>
    %cst_21 = arith.constant 3.200000e+01 : f32
    %55 = vector.broadcast %cst_21 : f32 to vector<4x1xf32>
    %56 = arith.divf %54, %55 : vector<4x1xf32>
    %57 = vector.broadcast %56 : vector<4x1xf32> to vector<4x32xf32>
    %58 = arith.subf %52, %57 : vector<4x32xf32>
    %59 = arith.mulf %58, %58 : vector<4x32xf32>
    %cst_22 = arith.constant dense<0.000000e+00> : vector<4xf32>
    %60 = vector.multi_reduction <add>, %59, %cst_22 [1] : vector<4x32xf32> to vector<4xf32>
    %61 = vector.shape_cast %60 : vector<4xf32> to vector<4x1xf32>
    %cst_23 = arith.constant 3.200000e+01 : f32
    %62 = vector.broadcast %cst_23 : f32 to vector<4x1xf32>
    %63 = arith.divf %61, %62 : vector<4x1xf32>
    %64 = vector.broadcast %56 : vector<4x1xf32> to vector<4x32xf32>
    %65 = arith.subf %52, %64 : vector<4x32xf32>
    %cst_24 = arith.constant 9.99999974E-6 : f32
    %66 = vector.broadcast %cst_24 : f32 to vector<4x1xf32>
    %67 = arith.addf %63, %66 : vector<4x1xf32>
    %68 = math.rsqrt %67 : vector<4x1xf32>
    %69 = vector.broadcast %68 : vector<4x1xf32> to vector<4x32xf32>
    %70 = arith.mulf %65, %69 : vector<4x32xf32>
    %71 = vector.broadcast %9 : vector<1x32xf32> to vector<4x32xf32>
    %72 = arith.mulf %70, %71 : vector<4x32xf32>
    %73 = vector.broadcast %10 : vector<1x32xf32> to vector<4x32xf32>
    %74 = arith.addf %72, %73 : vector<4x32xf32>
    %c48 = arith.constant 48 : index
    %c0_25 = arith.constant 0 : index
    %75 = vector.load %arg5[%c48, %c0_25] : memref<272x32xf32, #tpu.memory_space<vmem>>, vector<16x16xf32>
    %cst_26 = arith.constant dense<0.000000e+00> : vector<4x16xf32>
    %76 = tpu.matmul %2, %75, %cst_26 {dimension_numbers = #tpu.dot_dimension_numbers<[1], [0], [0], [1], [0, 0, 1, 1], [], []>} : vector<4x16xf32>, vector<16x16xf32>, vector<4x16xf32> -> vector<4x16xf32>
    %77 = vector.broadcast %11 : vector<1x16xf32> to vector<4x16xf32>
    %78 = arith.addf %76, %77 : vector<4x16xf32>
    %cst_27 = arith.constant 0.000000e+00 : f32
    %79 = vector.broadcast %cst_27 : f32 to vector<4x16xf32>
    %80 = arith.maximumf %78, %79 : vector<4x16xf32>
    %cst_28 = arith.constant dense<0.000000e+00> : vector<4xf32>
    %81 = vector.multi_reduction <add>, %80, %cst_28 [1] : vector<4x16xf32> to vector<4xf32>
    %82 = vector.shape_cast %81 : vector<4xf32> to vector<4x1xf32>
    %cst_29 = arith.constant 1.600000e+01 : f32
    %83 = vector.broadcast %cst_29 : f32 to vector<4x1xf32>
    %84 = arith.divf %82, %83 : vector<4x1xf32>
    %85 = vector.broadcast %84 : vector<4x1xf32> to vector<4x16xf32>
    %86 = arith.subf %80, %85 : vector<4x16xf32>
    %87 = arith.mulf %86, %86 : vector<4x16xf32>
    %cst_30 = arith.constant dense<0.000000e+00> : vector<4xf32>
    %88 = vector.multi_reduction <add>, %87, %cst_30 [1] : vector<4x16xf32> to vector<4xf32>
    %89 = vector.shape_cast %88 : vector<4xf32> to vector<4x1xf32>
    %cst_31 = arith.constant 1.600000e+01 : f32
    %90 = vector.broadcast %cst_31 : f32 to vector<4x1xf32>
    %91 = arith.divf %89, %90 : vector<4x1xf32>
    %92 = vector.broadcast %84 : vector<4x1xf32> to vector<4x16xf32>
    %93 = arith.subf %80, %92 : vector<4x16xf32>
    %cst_32 = arith.constant 9.99999974E-6 : f32
    %94 = vector.broadcast %cst_32 : f32 to vector<4x1xf32>
    %95 = arith.addf %91, %94 : vector<4x1xf32>
    %96 = math.rsqrt %95 : vector<4x1xf32>
    %97 = vector.broadcast %96 : vector<4x1xf32> to vector<4x16xf32>
    %98 = arith.mulf %93, %97 : vector<4x16xf32>
    %99 = vector.broadcast %12 : vector<1x16xf32> to vector<4x16xf32>
    %100 = arith.mulf %98, %99 : vector<4x16xf32>
    %101 = vector.broadcast %13 : vector<1x16xf32> to vector<4x16xf32>
    %102 = arith.addf %100, %101 : vector<4x16xf32>
    %c64 = arith.constant 64 : index
    %c0_33 = arith.constant 0 : index
    %103 = vector.load %arg5[%c64, %c0_33] : memref<272x32xf32, #tpu.memory_space<vmem>>, vector<16x16xf32>
    %cst_34 = arith.constant dense<0.000000e+00> : vector<4x16xf32>
    %104 = tpu.matmul %102, %103, %cst_34 {dimension_numbers = #tpu.dot_dimension_numbers<[1], [0], [0], [1], [0, 0, 1, 1], [], []>} : vector<4x16xf32>, vector<16x16xf32>, vector<4x16xf32> -> vector<4x16xf32>
    %105 = vector.broadcast %14 : vector<1x16xf32> to vector<4x16xf32>
    %106 = arith.addf %104, %105 : vector<4x16xf32>
    %cst_35 = arith.constant 0.000000e+00 : f32
    %107 = vector.broadcast %cst_35 : f32 to vector<4x16xf32>
    %108 = arith.maximumf %106, %107 : vector<4x16xf32>
    %cst_36 = arith.constant 0.000000e+00 : f32
    %109 = vector.broadcast %cst_36 : f32 to vector<4x128xf32>
    %c0_37 = arith.constant 0 : index
    %c0_38 = arith.constant 0 : index
    %110 = vector.load %arg8[%c0_37, %c0_38] : memref<4x128xf32, #tpu.memory_space<vmem>>, vector<4x128xf32>
    tpu.vector_store %arg8[%c0_37, %c0_38], %109 {strides = array<i32>} : memref<4x128xf32, #tpu.memory_space<vmem>>, vector<4x128xf32>,
    %c0_39 = arith.constant 0 : index
    %c0_40 = arith.constant 0 : index
    %111 = vector.load %arg8[%c0_39, %c0_40] : memref<4x128xf32, #tpu.memory_space<vmem>>, vector<4x64xf32>
    tpu.vector_store %arg8[%c0_39, %c0_40], %0 {strides = array<i32>} : memref<4x128xf32, #tpu.memory_space<vmem>>, vector<4x64xf32>,
    %c0_41 = arith.constant 0 : index
    %c64_42 = arith.constant 64 : index
    %112 = vector.load %arg8[%c0_41, %c64_42] : memref<4x128xf32, #tpu.memory_space<vmem>>, vector<4x32xf32>
    tpu.vector_store %arg8[%c0_41, %c64_42], %74 {strides = array<i32>} : memref<4x128xf32, #tpu.memory_space<vmem>>, vector<4x32xf32>,
    %c0_43 = arith.constant 0 : index
    %c96 = arith.constant 96 : index
    %113 = vector.load %arg8[%c0_43, %c96] : memref<4x128xf32, #tpu.memory_space<vmem>>, vector<4x16xf32>
    tpu.vector_store %arg8[%c0_43, %c96], %108 {strides = array<i32>} : memref<4x128xf32, #tpu.memory_space<vmem>>, vector<4x16xf32>,
    %c0_44 = arith.constant 0 : index
    %c0_45 = arith.constant 0 : index
    %114 = vector.load %arg8[%c0_44, %c0_45] : memref<4x128xf32, #tpu.memory_space<vmem>>, vector<4x128xf32>
    %c0_46 = arith.constant 0 : index
    %c0_47 = arith.constant 0 : index
    %115 = vector.load %arg4[%c0_46, %c0_47] : memref<128x192xf32, #tpu.memory_space<vmem>>, vector<128x192xf32>
    %cst_48 = arith.constant dense<0.000000e+00> : vector<4x192xf32>
    %116 = tpu.matmul %114, %115, %cst_48 {dimension_numbers = #tpu.dot_dimension_numbers<[1], [0], [0], [1], [0, 0, 1, 1], [], []>} : vector<4x128xf32>, vector<128x192xf32>, vector<4x192xf32> -> vector<4x192xf32>
    %117 = vector.broadcast %15 : vector<1x192xf32> to vector<4x192xf32>
    %118 = arith.addf %116, %117 : vector<4x192xf32>
    %cst_49 = arith.constant 0.000000e+00 : f32
    %119 = vector.broadcast %cst_49 : f32 to vector<4x192xf32>
    %120 = arith.maximumf %118, %119 : vector<4x192xf32>
    %c80 = arith.constant 80 : index
    %c0_50 = arith.constant 0 : index
    %121 = vector.load %arg5[%c80, %c0_50] : memref<272x32xf32, #tpu.memory_space<vmem>>, vector<192x32xf32>
    %cst_51 = arith.constant dense<0.000000e+00> : vector<4x32xf32>
    %122 = tpu.matmul %120, %121, %cst_51 {dimension_numbers = #tpu.dot_dimension_numbers<[1], [0], [0], [1], [0, 0, 1, 1], [], []>} : vector<4x192xf32>, vector<192x32xf32>, vector<4x32xf32> -> vector<4x32xf32>
    %123 = vector.broadcast %16 : vector<1x32xf32> to vector<4x32xf32>
    %124 = arith.addf %122, %123 : vector<4x32xf32>
    %125 = tpu.iota {dimensions = array<i32: 1>} : vector<4x32xi32>
    %c8_i32 = arith.constant 8 : i32
    %126 = vector.broadcast %c8_i32 : i32 to vector<4x32xi32>
    %127 = arith.cmpi slt, %125, %126 : vector<4x32xi32>
    %cst_52 = arith.constant 0.000000e+00 : f32
    %128 = vector.broadcast %cst_52 : f32 to vector<4x32xf32>
    %129 = arith.select %127, %124, %128 : vector<4x32xi1>, vector<4x32xf32>
    %cst_53 = arith.constant dense<0.000000e+00> : vector<4xf32>
    %130 = vector.multi_reduction <add>, %129, %cst_53 [1] : vector<4x32xf32> to vector<4xf32>
    %131 = vector.shape_cast %130 : vector<4xf32> to vector<4x1xf32>
    %cst_54 = arith.constant 2.000000e-01 : f32
    %132 = vector.broadcast %cst_54 : f32 to vector<4x1xf32>
    %133 = arith.mulf %131, %132 : vector<4x1xf32>
    %c5_i32 = arith.constant 5 : i32
    %134 = vector.broadcast %c5_i32 : i32 to vector<4x32xi32>
    %135 = arith.cmpi slt, %125, %134 : vector<4x32xi32>
    %136 = vector.broadcast %133 : vector<4x1xf32> to vector<4x32xf32>
    %137 = arith.subf %124, %136 : vector<4x32xf32>
    %cst_55 = arith.constant 0.000000e+00 : f32
    %138 = vector.broadcast %cst_55 : f32 to vector<4x32xf32>
    %139 = arith.select %135, %137, %138 : vector<4x32xi1>, vector<4x32xf32>
    %140 = arith.mulf %139, %139 : vector<4x32xf32>
    %cst_56 = arith.constant dense<0.000000e+00> : vector<4xf32>
    %141 = vector.multi_reduction <add>, %140, %cst_56 [1] : vector<4x32xf32> to vector<4xf32>
    %142 = vector.shape_cast %141 : vector<4xf32> to vector<4x1xf32>
    %cst_57 = arith.constant 2.500000e-01 : f32
    %143 = vector.broadcast %cst_57 : f32 to vector<4x1xf32>
    %144 = arith.mulf %142, %143 : vector<4x1xf32>
    %145 = math.sqrt %144 : vector<4x1xf32>
    %cst_58 = arith.constant 0.000000e+00 : f32
    %146 = vector.broadcast %cst_58 : f32 to vector<4x32xf32>
    %147 = arith.maximumf %124, %146 : vector<4x32xf32>
    %148 = vector.broadcast %17 : vector<1x32xf32> to vector<4x32xf32>
    %149 = arith.mulf %147, %148 : vector<4x32xf32>
    %cst_59 = arith.constant dense<0.000000e+00> : vector<4xf32>
    %150 = vector.multi_reduction <add>, %149, %cst_59 [1] : vector<4x32xf32> to vector<4xf32>
    %151 = vector.shape_cast %150 : vector<4xf32> to vector<4x1xf32>
    %152 = vector.broadcast %18 : vector<1x1xf32> to vector<4x1xf32>
    %153 = arith.addf %151, %152 : vector<4x1xf32>
    %cst_60 = arith.constant 0.000000e+00 : f32
    %154 = vector.broadcast %cst_60 : f32 to vector<4x1xf32>
    %155 = arith.subf %154, %153 : vector<4x1xf32>
    %156 = math.exp %155 : vector<4x1xf32>
    %cst_61 = arith.constant 1.000000e+00 : f32
    %157 = vector.broadcast %cst_61 : f32 to vector<4x1xf32>
    %158 = arith.addf %157, %156 : vector<4x1xf32>
    %159 = tpu.reciprocal %158 {approx = true} : vector<4x1xf32> -> vector<4x1xf32>
    %cst_62 = arith.constant 5.000000e-01 : f32
    %160 = vector.broadcast %cst_62 : f32 to vector<4x1xf32>
    %161 = arith.mulf %160, %145 : vector<4x1xf32>
    %162 = arith.subf %133, %161 : vector<4x1xf32>
    %cst_63 = arith.constant 2.000000e+00 : f32
    %163 = vector.broadcast %cst_63 : f32 to vector<4x1xf32>
    %164 = arith.mulf %163, %159 : vector<4x1xf32>
    %165 = arith.subf %162, %164 : vector<4x1xf32>
    %166 = arith.subf %165, %3 : vector<4x1xf32>
    %167 = tpu.iota {dimensions = array<i32: 1>} : vector<4x128xi32>
    %c0_i32 = arith.constant 0 : i32
    %168 = vector.broadcast %c0_i32 : i32 to vector<4x128xi32>
    %169 = arith.cmpi eq, %167, %168 : vector<4x128xi32>
    %c1_i32 = arith.constant 1 : i32
    %170 = vector.broadcast %c1_i32 : i32 to vector<4x128xi32>
    %171 = arith.cmpi eq, %167, %170 : vector<4x128xi32>
    %c2_i32 = arith.constant 2 : i32
    %172 = vector.broadcast %c2_i32 : i32 to vector<4x128xi32>
    %173 = arith.cmpi eq, %167, %172 : vector<4x128xi32>
    %c3_i32 = arith.constant 3 : i32
    %174 = vector.broadcast %c3_i32 : i32 to vector<4x128xi32>
    %175 = arith.cmpi eq, %167, %174 : vector<4x128xi32>
    %cst_64 = arith.constant 0.000000e+00 : f32
    %176 = vector.shape_cast %159 : vector<4x1xf32> to vector<4x1xf32>
    %177 = vector.broadcast %176 : vector<4x1xf32> to vector<4x128xf32>
    %178 = vector.broadcast %cst_64 : f32 to vector<4x128xf32>
    %179 = arith.select %175, %177, %178 : vector<4x128xi1>, vector<4x128xf32>
    %180 = vector.shape_cast %145 : vector<4x1xf32> to vector<4x1xf32>
    %181 = vector.broadcast %180 : vector<4x1xf32> to vector<4x128xf32>
    %182 = arith.select %173, %181, %179 : vector<4x128xi1>, vector<4x128xf32>
    %183 = vector.shape_cast %133 : vector<4x1xf32> to vector<4x1xf32>
    %184 = vector.broadcast %183 : vector<4x1xf32> to vector<4x128xf32>
    %185 = arith.select %171, %184, %182 : vector<4x128xi1>, vector<4x128xf32>
    %186 = vector.shape_cast %166 : vector<4x1xf32> to vector<4x1xf32>
    %187 = vector.broadcast %186 : vector<4x1xf32> to vector<4x128xf32>
    %188 = arith.select %169, %187, %185 : vector<4x128xi1>, vector<4x128xf32>
    %c0_65 = arith.constant 0 : index
    %c0_66 = arith.constant 0 : index
    %189 = vector.load %arg7[%c0_65, %c0_66] : memref<4x128xf32, #tpu.memory_space<vmem>>, vector<4x128xf32>
    tpu.vector_store %arg7[%c0_65, %c0_66], %188 {strides = array<i32>} : memref<4x128xf32, #tpu.memory_space<vmem>>, vector<4x128xf32>,
    return
  }
}

</mosaic_0001>

<llo_original>
// kernel: robust_reward_pallas.1
$region0: #{robust_reward_pallas.1}
  #allocation0 [shape = 'u32[]', space=smem, size = 0x4, offset = 0x4, fixed_abs, tag = 'smem constant byte address 0x4 - core index']
  #allocation1 [shape = 'u32[72,128]{1,0:T(1,128)}', space=vmem, size = 0x9000, scoped, tag = 'internal scratch']
  #allocation2 [shape = 'f32[4,128]{1,0:T(4,128)}', space=vmem, size = 0x800, scoped, tag = 'scratch operand']
  %s0 = inlined_call_operand.vmem [shape: f32[4,64], index: 0, kind: input, shape index: {}]
  %s1 = inlined_call_operand.vmem [shape: f32[4,16], index: 1, kind: input, shape index: {}]
  %s2 = inlined_call_operand.vmem [shape: f32[4,16], index: 2, kind: input, shape index: {}]
  %s3 = inlined_call_operand.vmem [shape: f32[4,1], index: 3, kind: input, shape index: {}]
  %s4 = inlined_call_operand.vmem [shape: f32[128,192], index: 4, kind: input, shape index: {}]
  %s5 = inlined_call_operand.vmem [shape: f32[272,32], index: 5, kind: input, shape index: {}]
  %s6 = inlined_call_operand.vmem [shape: f32[16,192], index: 6, kind: input, shape index: {}]
  %s7 = inlined_call_operand.vmem [shape: f32[4,128], index: 7, kind: output, shape index: {}]
  %s8 = sld [smem:[#allocation0]]
  $region38: #{robust_reward_pallas.1} parent=0
    _
  %s10 = ssub.s32 1, %s8
  %s11 = scalar_select 0, %s10, %s8
  // Predicated region
  $region2: #{robust_reward_pallas.1} parent=0 // pred_check
    _
  $region3: #{robust_reward_pallas.1} parent=0 // pred_check_branch
    %13 = sbr.rel (0) target = $region5
  $region4: #{robust_reward_pallas.1} parent=0 // pred_region
    _
  $region5: #{robust_reward_pallas.1} parent=0 // pred_fallthru
    _
  // Predicated region
  $region6: #{robust_reward_pallas.1} parent=0 // pred_check
    _
  $region7: #{robust_reward_pallas.1} parent=0 // pred_check_branch
    %15 = sbr.rel (0) target = $region9
  $region8: #{robust_reward_pallas.1} parent=0 // pred_region
    _
  $region9: #{robust_reward_pallas.1} parent=0 // pred_fallthru
    _
  // Predicated region
  $region10: #{robust_reward_pallas.1} parent=0 // pred_check
    _
  $region11: #{robust_reward_pallas.1} parent=0 // pred_check_branch
    %17 = sbr.rel (0) target = $region13
  $region12: #{robust_reward_pallas.1} parent=0 // pred_region
    _
  $region13: #{robust_reward_pallas.1} parent=0 // pred_fallthru
    _
  // Predicated region
  $region14: #{robust_reward_pallas.1} parent=0 // pred_check
    _
  $region15: #{robust_reward_pallas.1} parent=0 // pred_check_branch
    %19 = sbr.rel (0) target = $region17
  $region16: #{robust_reward_pallas.1} parent=0 // pred_region
    _
  $region17: #{robust_reward_pallas.1} parent=0 // pred_fallthru
    _
  // Predicated region
  $region18: #{robust_reward_pallas.1} parent=0 // pred_check
    _
  $region19: #{robust_reward_pallas.1} parent=0 // pred_check_branch
    %21 = sbr.rel (0) target = $region21
  $region20: #{robust_reward_pallas.1} parent=0 // pred_region
    _
  $region21: #{robust_reward_pallas.1} parent=0 // pred_fallthru
    _
  // Predicated region
  $region22: #{robust_reward_pallas.1} parent=0 // pred_check
    _
  $region23: #{robust_reward_pallas.1} parent=0 // pred_check_branch
    %23 = sbr.rel (0) target = $region25
  $region24: #{robust_reward_pallas.1} parent=0 // pred_region
    _
  $region25: #{robust_reward_pallas.1} parent=0 // pred_fallthru
    _
  // Predicated region
  $region26: #{robust_reward_pallas.1} parent=0 // pred_check
    _
  $region27: #{robust_reward_pallas.1} parent=0 // pred_check_branch
    %25 = sbr.rel (0) target = $region29
  $region28: #{robust_reward_pallas.1} parent=0 // pred_region
    _
  $region29: #{robust_reward_pallas.1} parent=0 // pred_fallthru
    _
  %v26 = vld [vmem:[%s0] sm:$0xf]
  %v27 = vld [vmem:[%s1] sm:$0xf]
  %v28 = vld [vmem:[%s2] sm:$0xf]
  %v29 = vld [vmem:[%s3] sm:$0xf]
  %v30 = vld [vmem:[%s6] sm:$0xff]
  %v31 = vld [vmem:[%s6 + $0x10] sm:$0xff]
  %v32 = vld [vmem:[%s6 + $0x18] sm:$0xff]
  %v33 = vld [vmem:[%s5] sm:$0xff]
  %v34 = vld [vmem:[%s5 + $0x8] sm:$0xff]
  %v35 = vperm.slane %v30, 0
  %vm36 = vcmask 130048
  %v38 = vsel %vm36, %v27, 0
  %40 = vmatpush.msra.mxu0 0.0
  %41 = vmatpush.msra.mxu0 0.0
  %42 = vmatpush.msra.mxu0 0.0
  %43 = vmatpush.msra.mxu0 0.0
  %44 = vmatpush.msra.mxu0 0.0
  %45 = vmatpush.msra.mxu0 0.0
  %46 = vmatpush.msra.mxu0 0.0
  %47 = vmatpush.msra.mxu0 0.0
  %48 = vmatpush.msra.mxu0 0.0
  %49 = vmatpush.msra.mxu0 0.0
  %50 = vmatpush.msra.mxu0 0.0
  %51 = vmatpush.msra.mxu0 0.0
  %52 = vmatpush.msra.mxu0 0.0
  %53 = vmatpush.msra.mxu0 0.0
  %54 = vmatpush.msra.mxu0 %v34
  %55 = vmatpush.msra.mxu0 %v33
  %56 = vmatmul.f32.gmra.mxu0 %v38
  %v57 = vpop.f32.mrf.mxu0
  %v58 = vadd.f32 %v35, %v57
  %59 = vdwg.mxu0
  %v60 = vmax.f32 %v58, 0.0
  %vm61 = vcmask 257024
  %v62 = vsel %vm61, %v60, 0.0
  %63 = vadd.xlane.f32.xlu0 %v62
  %v64 = vpop.xlane.xlu0 %63
  %v65 = vrcp.pop 32.0
  %v66 = vmul.f32 32.0, %v65
  %v67 = vsub.f32 1.0, %v66
  %v68 = vmul.f32 %v65, %v67
  %v69 = vadd.f32 %v65, %v68
  %vm70 = vweird.f32 %v65
  %v71 = vsel %vm70, %v65, %v69
  %v72 = vmul.f32 %v64, %v71
  %v73 = vsub.f32 %v60, %v72
  %v74 = vmul.f32 %v73, %v73
  %v75 = vsel %vm61, %v74, 0.0
  %76 = vadd.xlane.f32.xlu0 %v75
  %v77 = vpop.xlane.xlu0 %76
  %v78 = vmul.f32 %v77, %v71
  %v79 = vadd.f32 %v78, 1e-05
  %v80 = vrsqrt.pop %v79
  %v81 = vmul.f32 %v80, %v79
  %v82 = vmul.f32 %v81, %v80
  %v83 = vmul.f32 0.5, %v82
  %v84 = vsub.f32 1.5, %v83
  %v85 = vmul.f32 %v80, %v84
  %vm86 = vweird.f32 %v79
  %vm87 = vweird.f32 %v80
  %vm88 = vmor %vm86, %vm87
  %v89 = vsel %vm88, %v80, %v85
  %v90 = vmul.f32 %v73, %v89
  %v91 = vperm.slane %v30, 1
  %v92 = vmul.f32 %v90, %v91
  %v93 = vperm.slane %v30, 2
  %v94 = vadd.f32 %v92, %v93
  %v95 = vld [vmem:[%s5 + $0x10] sm:$0xff]
  %v96 = vld [vmem:[%s5 + $0x18] sm:$0xff]
  %v97 = vld [vmem:[%s5 + $0x20] sm:$0xff]
  %v98 = vld [vmem:[%s5 + $0x28] sm:$0xff]
  %v99 = vperm.slane %v30, 3
  %vm100 = vcmask 261120
  %v102 = vsel %vm100, %v94, 0
  %104 = vmatpush.msra.mxu0 0.0
  %105 = vmatpush.msra.mxu0 0.0
  %106 = vmatpush.msra.mxu0 0.0
  %107 = vmatpush.msra.mxu0 0.0
  %108 = vmatpush.msra.mxu0 0.0
  %109 = vmatpush.msra.mxu0 0.0
  %110 = vmatpush.msra.mxu0 0.0
  %111 = vmatpush.msra.mxu0 0.0
  %112 = vmatpush.msra.mxu0 0.0
  %113 = vmatpush.msra.mxu0 0.0
  %114 = vmatpush.msra.mxu0 0.0
  %115 = vmatpush.msra.mxu0 0.0
  %116 = vmatpush.msra.mxu0 %v98
  %117 = vmatpush.msra.mxu0 %v97
  %118 = vmatpush.msra.mxu0 %v96
  %119 = vmatpush.msra.mxu0 %v95
  %120 = vmatmul.f32.gmra.mxu0 %v102
  %v121 = vpop.f32.mrf.mxu0
  %v122 = vadd.f32 %v99, %v121
  %123 = vdwg.mxu0
  %v124 = vmax.f32 %v122, 0.0
  %v125 = vsel %vm61, %v124, 0.0
  %126 = vadd.xlane.f32.xlu0 %v125
  %v127 = vpop.xlane.xlu0 %126
  %v128 = vmul.f32 %v127, %v71
  %v129 = vsub.f32 %v124, %v128
  %v130 = vmul.f32 %v129, %v129
  %v131 = vsel %vm61, %v130, 0.0
  %132 = vadd.xlane.f32.xlu0 %v131
  %v133 = vpop.xlane.xlu0 %132
  %v134 = vmul.f32 %v133, %v71
  %v135 = vadd.f32 %v134, 1e-05
  %v136 = vrsqrt.pop %v135
  %v137 = vmul.f32 %v136, %v135
  %v138 = vmul.f32 %v137, %v136
  %v139 = vmul.f32 0.5, %v138
  %v140 = vsub.f32 1.5, %v139
  %v141 = vmul.f32 %v136, %v140
  %vm142 = vweird.f32 %v135
  %vm143 = vweird.f32 %v136
  %vm144 = vmor %vm142, %vm143
  %v145 = vsel %vm144, %v136, %v141
  %v146 = vmul.f32 %v129, %v145
  %v147 = vperm.slane %v30, 4
  %v148 = vmul.f32 %v146, %v147
  %v149 = vperm.slane %v30, 5
  %v150 = vadd.f32 %v148, %v149
  %v151 = vld [vmem:[%s5 + $0x30] sm:$0xff]
  %v152 = vld [vmem:[%s5 + $0x38] sm:$0xff]
  %v153 = vperm.slane %v30, 6
  %v155 = vsel %vm36, %v28, 0
  %157 = vmatpush.msra.mxu0 0.0
  %158 = vmatpush.msra.mxu0 0.0
  %159 = vmatpush.msra.mxu0 0.0
  %160 = vmatpush.msra.mxu0 0.0
  %161 = vmatpush.msra.mxu0 0.0
  %162 = vmatpush.msra.mxu0 0.0
  %163 = vmatpush.msra.mxu0 0.0
  %164 = vmatpush.msra.mxu0 0.0
  %165 = vmatpush.msra.mxu0 0.0
  %166 = vmatpush.msra.mxu0 0.0
  %167 = vmatpush.msra.mxu0 0.0
  %168 = vmatpush.msra.mxu0 0.0
  %169 = vmatpush.msra.mxu0 0.0
  %170 = vmatpush.msra.mxu0 0.0
  %171 = vmatpush.msra.mxu0 %v152
  %172 = vmatpush.msra.mxu0 %v151
  %173 = vmatmul.f32.gmra.mxu0 %v155
  %v174 = vpop.f32.mrf.mxu0
  %v175 = vadd.f32 %v153, %v174
  %176 = vdwg.mxu0
  %v177 = vmax.f32 %v175, 0.0
  %vm178 = vcmask 125952
  %v179 = vsel %vm178, %v177, 0.0
  %180 = vadd.xlane.f32.xlu0 %v179
  %v181 = vpop.xlane.xlu0 %180
  %v182 = vrcp.pop 16.0
  %v183 = vmul.f32 16.0, %v182
  %v184 = vsub.f32 1.0, %v183
  %v185 = vmul.f32 %v182, %v184
  %v186 = vadd.f32 %v182, %v185
  %vm187 = vweird.f32 %v182
  %v188 = vsel %vm187, %v182, %v186
  %v189 = vmul.f32 %v181, %v188
  %v190 = vsub.f32 %v177, %v189
  %v191 = vmul.f32 %v190, %v190
  %v192 = vsel %vm178, %v191, 0.0
  %193 = vadd.xlane.f32.xlu0 %v192
  %v194 = vpop.xlane.xlu0 %193
  %v195 = vmul.f32 %v194, %v188
  %v196 = vadd.f32 %v195, 1e-05
  %v197 = vrsqrt.pop %v196
  %v198 = vmul.f32 %v197, %v196
  %v199 = vmul.f32 %v198, %v197
  %v200 = vmul.f32 0.5, %v199
  %v201 = vsub.f32 1.5, %v200
  %v202 = vmul.f32 %v197, %v201
  %vm203 = vweird.f32 %v196
  %vm204 = vweird.f32 %v197
  %vm205 = vmor %vm203, %vm204
  %v206 = vsel %vm205, %v197, %v202
  %v207 = vmul.f32 %v190, %v206
  %v208 = vperm.slane %v30, 7
  %v209 = vmul.f32 %v207, %v208
  %v210 = vperm.slane %v31, 0
  %v211 = vadd.f32 %v209, %v210
  %v212 = vld [vmem:[%s5 + $0x40] sm:$0xff]
  %v213 = vld [vmem:[%s5 + $0x48] sm:$0xff]
  %v214 = vperm.slane %v31, 1
  %v216 = vsel %vm36, %v211, 0
  %218 = vmatpush.msra.mxu0 0.0
  %219 = vmatpush.msra.mxu0 0.0
  %220 = vmatpush.msra.mxu0 0.0
  %221 = vmatpush.msra.mxu0 0.0
  %222 = vmatpush.msra.mxu0 0.0
  %223 = vmatpush.msra.mxu0 0.0
  %224 = vmatpush.msra.mxu0 0.0
  %225 = vmatpush.msra.mxu0 0.0
  %226 = vmatpush.msra.mxu0 0.0
  %227 = vmatpush.msra.mxu0 0.0
  %228 = vmatpush.msra.mxu0 0.0
  %229 = vmatpush.msra.mxu0 0.0
  %230 = vmatpush.msra.mxu0 0.0
  %231 = vmatpush.msra.mxu0 0.0
  %232 = vmatpush.msra.mxu0 %v213
  %233 = vmatpush.msra.mxu0 %v212
  %234 = vmatmul.f32.gmra.mxu0 %v216
  %v235 = vpop.f32.mrf.mxu0
  %v236 = vadd.f32 %v214, %v235
  %237 = vdwg.mxu0
  %v238 = vmax.f32 %v236, 0.0
  %239 = vst [vmem:[#allocation2] sm:$0xf] 0.0
  %vm240 = vcmask 519168
  %241 = vst.msk [vmem:[#allocation2] sm:$0xf] %vm240, %v26
  %243 = vrot.lane.b32.xlu0 %v150, 64
  %v244 = vpop.permute.xlu0 %243
  %vm246 = vcmask 781824
  %247 = vst.msk [vmem:[#allocation2] sm:$0xf] %vm246, %v244
  %249 = vrot.lane.b32.xlu0 %v238, 96
  %v250 = vpop.permute.xlu0 %249
  %vm252 = vcmask 913152
  %253 = vst.msk [vmem:[#allocation2] sm:$0xf] %vm252, %v250
  %v254 = vld [vmem:[#allocation2] sm:$0xf]
  %v255 = vld [vmem:[%s4] sm:$0xff]
  %v256 = vld [vmem:[%s4 + $0x8] sm:$0xff]
  %v257 = vld [vmem:[%s4 + $0x10] sm:$0xff]
  %v258 = vld [vmem:[%s4 + $0x18] sm:$0xff]
  %v259 = vld [vmem:[%s4 + $0x20] sm:$0xff]
  %v260 = vld [vmem:[%s4 + $0x28] sm:$0xff]
  %v261 = vld [vmem:[%s4 + $0x30] sm:$0xff]
  %v262 = vld [vmem:[%s4 + $0x38] sm:$0xff]
  %v263 = vld [vmem:[%s4 + $0x40] sm:$0xff]
  %v264 = vld [vmem:[%s4 + $0x48] sm:$0xff]
  %v265 = vld [vmem:[%s4 + $0x50] sm:$0xff]
  %v266 = vld [vmem:[%s4 + $0x58] sm:$0xff]
  %v267 = vld [vmem:[%s4 + $0x60] sm:$0xff]
  %v268 = vld [vmem:[%s4 + $0x68] sm:$0xff]
  %v269 = vld [vmem:[%s4 + $0x70] sm:$0xff]
  %v270 = vld [vmem:[%s4 + $0x78] sm:$0xff]
  %v271 = vld [vmem:[%s4 + $0x80] sm:$0xff]
  %v272 = vld [vmem:[%s4 + $0x88] sm:$0xff]
  %v273 = vld [vmem:[%s4 + $0x90] sm:$0xff]
  %v274 = vld [vmem:[%s4 + $0x98] sm:$0xff]
  %v275 = vld [vmem:[%s4 + $0xa0] sm:$0xff]
  %v276 = vld [vmem:[%s4 + $0xa8] sm:$0xff]
  %v277 = vld [vmem:[%s4 + $0xb0] sm:$0xff]
  %v278 = vld [vmem:[%s4 + $0xb8] sm:$0xff]
  %v279 = vld [vmem:[%s4 + $0xc0] sm:$0xff]
  %v280 = vld [vmem:[%s4 + $0xc8] sm:$0xff]
  %v281 = vld [vmem:[%s4 + $0xd0] sm:$0xff]
  %v282 = vld [vmem:[%s4 + $0xd8] sm:$0xff]
  %v283 = vld [vmem:[%s4 + $0xe0] sm:$0xff]
  %v284 = vld [vmem:[%s4 + $0xe8] sm:$0xff]
  %v285 = vld [vmem:[%s4 + $0xf0] sm:$0xff]
  %v286 = vld [vmem:[%s4 + $0xf8] sm:$0xff]
  %v287 = vperm.slane %v31, 2
  %v288 = vperm.slane %v32, 2
  %289 = vmatpush.msra.mxu0 %v285
  %290 = vmatpush.msra.mxu0 %v283
  %291 = vmatpush.msra.mxu0 %v281
  %292 = vmatpush.msra.mxu0 %v279
  %293 = vmatpush.msra.mxu0 %v277
  %294 = vmatpush.msra.mxu0 %v275
  %295 = vmatpush.msra.mxu0 %v273
  %296 = vmatpush.msra.mxu0 %v271
  %297 = vmatpush.msra.mxu0 %v269
  %298 = vmatpush.msra.mxu0 %v267
  %299 = vmatpush.msra.mxu0 %v265
  %300 = vmatpush.msra.mxu0 %v263
  %301 = vmatpush.msra.mxu0 %v261
  %302 = vmatpush.msra.mxu0 %v259
  %303 = vmatpush.msra.mxu0 %v257
  %304 = vmatpush.msra.mxu0 %v255
  %305 = vmatmul.f32.gmra.mxu0 %v254
  %v306 = vpop.f32.mrf.mxu0
  %v307 = vadd.f32 %v287, %v306
  %308 = vdwg.mxu0
  %309 = vmatpush.msra.mxu0 %v286
  %310 = vmatpush.msra.mxu0 %v284
  %311 = vmatpush.msra.mxu0 %v282
  %312 = vmatpush.msra.mxu0 %v280
  %313 = vmatpush.msra.mxu0 %v278
  %314 = vmatpush.msra.mxu0 %v276
  %315 = vmatpush.msra.mxu0 %v274
  %316 = vmatpush.msra.mxu0 %v272
  %317 = vmatpush.msra.mxu0 %v270
  %318 = vmatpush.msra.mxu0 %v268
  %319 = vmatpush.msra.mxu0 %v266
  %320 = vmatpush.msra.mxu0 %v264
  %321 = vmatpush.msra.mxu0 %v262
  %322 = vmatpush.msra.mxu0 %v260
  %323 = vmatpush.msra.mxu0 %v258
  %324 = vmatpush.msra.mxu0 %v256
  %325 = vmatmul.f32.gmra.mxu0 %v254
  %v326 = vpop.f32.mrf.mxu0
  %v327 = vadd.f32 %v288, %v326
  %328 = vdwg.mxu0
  %v329 = vmax.f32 %v307, 0.0
  %v330 = vmax.f32 %v327, 0.0
  %v331 = vld [vmem:[%s5 + $0x50] sm:$0xff]
  %v332 = vld [vmem:[%s5 + $0x58] sm:$0xff]
  %v333 = vld [vmem:[%s5 + $0x60] sm:$0xff]
  %v334 = vld [vmem:[%s5 + $0x68] sm:$0xff]
  %v335 = vld [vmem:[%s5 + $0x70] sm:$0xff]
  %v336 = vld [vmem:[%s5 + $0x78] sm:$0xff]
  %v337 = vld [vmem:[%s5 + $0x80] sm:$0xff]
  %v338 = vld [vmem:[%s5 + $0x88] sm:$0xff]
  %v339 = vld [vmem:[%s5 + $0x90] sm:$0xff]
  %v340 = vld [vmem:[%s5 + $0x98] sm:$0xff]
  %v341 = vld [vmem:[%s5 + $0xa0] sm:$0xff]
  %v342 = vld [vmem:[%s5 + $0xa8] sm:$0xff]
  %v343 = vld [vmem:[%s5 + $0xb0] sm:$0xff]
  %v344 = vld [vmem:[%s5 + $0xb8] sm:$0xff]
  %v345 = vld [vmem:[%s5 + $0xc0] sm:$0xff]
  %v346 = vld [vmem:[%s5 + $0xc8] sm:$0xff]
  %v347 = vld [vmem:[%s5 + $0xd0] sm:$0xff]
  %v348 = vld [vmem:[%s5 + $0xd8] sm:$0xff]
  %v349 = vld [vmem:[%s5 + $0xe0] sm:$0xff]
  %v350 = vld [vmem:[%s5 + $0xe8] sm:$0xff]
  %v351 = vld [vmem:[%s5 + $0xf0] sm:$0xff]
  %v352 = vld [vmem:[%s5 + $0xf8] sm:$0xff]
  %v353 = vld [vmem:[%s5 + $0x100] sm:$0xff]
  %v354 = vld [vmem:[%s5 + $0x108] sm:$0xff]
  %v355 = vperm.slane %v31, 3
  %vm356 = vcmask 523264
  %v358 = vsel %vm356, %v330, 0
  %360 = vmatpush.msra.mxu0 %v346
  %361 = vmatpush.msra.mxu0 %v345
  %362 = vmatpush.msra.mxu0 %v344
  %363 = vmatpush.msra.mxu0 %v343
  %364 = vmatpush.msra.mxu0 %v342
  %365 = vmatpush.msra.mxu0 %v341
  %366 = vmatpush.msra.mxu0 %v340
  %367 = vmatpush.msra.mxu0 %v339
  %368 = vmatpush.msra.mxu0 %v338
  %369 = vmatpush.msra.mxu0 %v337
  %370 = vmatpush.msra.mxu0 %v336
  %371 = vmatpush.msra.mxu0 %v335
  %372 = vmatpush.msra.mxu0 %v334
  %373 = vmatpush.msra.mxu0 %v333
  %374 = vmatpush.msra.mxu0 %v332
  %375 = vmatpush.msra.mxu0 %v331
  %376 = vmatmul.f32.gmra.mxu0 %v329
  %v377 = vpop.f32.mrf.mxu0
  %v378 = vadd.f32 %v355, %v377
  %379 = vdwg.mxu0
  %380 = vmatpush.msra.mxu0 0.0
  %381 = vmatpush.msra.mxu0 0.0
  %382 = vmatpush.msra.mxu0 0.0
  %383 = vmatpush.msra.mxu0 0.0
  %384 = vmatpush.msra.mxu0 0.0
  %385 = vmatpush.msra.mxu0 0.0
  %386 = vmatpush.msra.mxu0 0.0
  %387 = vmatpush.msra.mxu0 0.0
  %388 = vmatpush.msra.mxu0 %v354
  %389 = vmatpush.msra.mxu0 %v353
  %390 = vmatpush.msra.mxu0 %v352
  %391 = vmatpush.msra.mxu0 %v351
  %392 = vmatpush.msra.mxu0 %v350
  %393 = vmatpush.msra.mxu0 %v349
  %394 = vmatpush.msra.mxu0 %v348
  %395 = vmatpush.msra.mxu0 %v347
  %396 = vmatmul.f32.gmra.mxu0 %v358
  %v397 = vpop.f32.mrf.mxu0
  %v398 = vadd.f32 %v378, %v397
  %399 = vdwg.mxu0
  %v400 = vlaneseq
  %v401 = vand.u32 %v400, 127
  %vm402 = vcmp.lt.s32.totalorder %v401, 8
  %v403 = vsel %vm402, %v398, 0.0
  %v404 = vsel %vm61, %v403, 0.0
  %405 = vadd.xlane.f32.xlu0 %v404
  %v406 = vpop.xlane.xlu0 %405
  %v407 = vmul.f32 %v406, 0.2
  %vm408 = vcmp.lt.s32.totalorder %v401, 5
  %v409 = vsub.f32 %v398, %v407
  %v410 = vsel %vm408, %v409, 0.0
  %v411 = vmul.f32 %v410, %v410
  %v412 = vsel %vm61, %v411, 0.0
  %413 = vadd.xlane.f32.xlu0 %v412
  %v414 = vpop.xlane.xlu0 %413
  %v415 = vmul.f32 %v414, 0.25
  %v416 = vrsqrt.pop %v415
  %v417 = vmul.f32 %v416, %v415
  %v418 = vmul.f32 %v417, %v416
  %v419 = vmul.f32 0.5, %v418
  %v420 = vsub.f32 1.5, %v419
  %v421 = vmul.f32 %v416, %v420
  %v422 = vmul.f32 %v415, %v421
  %vm423 = vcmp.eq.f32.partialorder %v415, inf
  %v424 = vsel %vm423, %v415, %v422
  %vm425 = vcmp.eq.f32.partialorder %v415, 0.0
  %v426 = vand.u32 %v415, 2147483648
  %v427 = vsel %vm425, %v426, %v424
  %v428 = vmax.f32 %v398, 0.0
  %v429 = vperm.slane %v31, 4
  %v430 = vmul.f32 %v428, %v429
  %v431 = vsel %vm61, %v430, 0.0
  %432 = vadd.xlane.f32.xlu0 %v431
  %v433 = vpop.xlane.xlu0 %432
  %v434 = vperm.slane %v31, 5
  %v435 = vadd.f32 %v433, %v434
  %v436 = vsub.f32 0.0, %v435
  %v437 = vmul.f32 %v436, 1.442695
  %v438 = vpow.pop %v437
  %v439 = vadd.f32 %v438, 1.0
  %v440 = vrcp.pop %v439
  %v441 = vmul.f32 %v427, 0.5
  %v442 = vsub.f32 %v407, %v441
  %v443 = vmul.f32 %v440, 2.0
  %v444 = vsub.f32 %v442, %v443
  %v445 = vsub.f32 %v444, %v29
  %vm446 = vcmp.eq.s32.totalorder %v401, 0
  %vm447 = vcmp.eq.s32.totalorder %v401, 1
  %vm448 = vcmp.eq.s32.totalorder %v401, 2
  %vm449 = vcmp.eq.s32.totalorder %v401, 3
  %451 = vset.pattern.permute.xlu0 0
  %452 = vperm.xlu0 %451, %v440
  %v453 = vpop.permute.xlu0 %452
  %v455 = vsel %vm449, %v453, 0.0
  %v456 = vsel %vm448, %v427, %v455
  %v457 = vsel %vm447, %v407, %v456
  %459 = vset.pattern.permute.xlu0 0
  %460 = vperm.xlu0 %459, %v445
  %v461 = vpop.permute.xlu0 %460
  %v463 = vsel %vm446, %v461, %v457
  %464 = vst [vmem:[%s7] sm:$0xf] %v463
  // Predicated region
  $region30: #{robust_reward_pallas.1} parent=0 // pred_check
    _
  $region31: #{robust_reward_pallas.1} parent=0 // pred_check_branch
    %466 = sbr.rel (0) target = $region33
  $region32: #{robust_reward_pallas.1} parent=0 // pred_region
    _
  $region33: #{robust_reward_pallas.1} parent=0 // pred_fallthru
    _
  // Predicated region
  $region34: #{robust_reward_pallas.1} parent=0 // pred_check
    _
  $region35: #{robust_reward_pallas.1} parent=0 // pred_check_branch
    %468 = sbr.rel (0) target = $region37
  $region36: #{robust_reward_pallas.1} parent=0 // pred_region
    _
  $region37: #{robust_reward_pallas.1} parent=0 // pred_fallthru
    _

</llo_original>
